<compile_context>
chip_gen: v7x
topology: tpu7x:2x2x1
jax: 0.10.0
libtpu: 0.0.40
codegen_flags: <defaults>
</compile_context>

<pallas_src>
import functools
import math

import jax
import jax.numpy as jnp
from jax.experimental import pallas as pl
from jax.experimental.pallas import tpu as pltpu


# ----------------------------------------------------------------------------
# Pallas kernel: full Block forward (time_step iterations) on VMEM-resident data
# ----------------------------------------------------------------------------
def block_kernel(
    x_ref,           # (N, D)            node features
    ea_ref,          # (E, edge_dim)     edge features
    S_ref,           # (E, N)  bf16      one-hot of edge source nodes
    T_ref,           # (E, N)  bf16      one-hot of edge target nodes
    w_node_ext_ref,  # (D, H*D + 2H)     [w_node | w_node@w_natt_j | w_node@w_natt_i]
    w_edge_ref,      # (edge_dim, H*D)
    w_eatt_ref,      # (H*D, H)          block-diag wa_e attention weights
    head_exp_ref,    # (H, H*D)  f32     block-ones head-expansion matrix
    w_scale_ref,     # (H*D, D)
    bias_ref,        # (1, D)
    w_gru_ref,       # (2D, 4D)          fused GRU weight [[Wir^T Wiz^T Win^T 0],[Whr^T Whz^T 0 Whn^T]]
    b_gru_ref,       # (1, 4D)           [b_ir+b_hr | b_iz+b_hz | b_in | b_hn]
    gamma_ref,       # (1, D)            LayerNorm weight
    beta_ref,        # (1, D)            LayerNorm bias
    out_ref,         # (N, D)
    *,
    time_step: int,
    negative_slope: float,
):
    N, D = x_ref.shape
    H = head_exp_ref.shape[0]
    HD = H * D
    f32 = jnp.float32
    bf16 = jnp.bfloat16

    S = S_ref[...]                       # bf16 (exact 0/1)
    T = T_ref[...]                       # bf16 (exact 0/1)
    w_node_ext = w_node_ext_ref[...]
    head_exp = head_exp_ref[...]         # f32 0/1
    head_exp_bf = head_exp.astype(bf16)
    w_scale = w_scale_ref[...]
    w_gru = w_gru_ref[...]

    # --- loop-invariant broadcasts, hoisted (JAX does not CSE broadcast_in_dim)
    bias = jnp.broadcast_to(bias_ref[...], (N, D))
    b_gru = jnp.broadcast_to(b_gru_ref[...], (N, 4 * D))
    gamma = jnp.broadcast_to(gamma_ref[...], (N, D))
    beta = jnp.broadcast_to(beta_ref[...], (N, D))

    # --- loop-invariant edge work (edge_attr never changes across time steps)
    e_proj = jnp.dot(ea_ref[...], w_edge_ref[...],
                     preferred_element_type=f32)                       # (E, H*D)
    edge_logit = jnp.dot(e_proj, w_eatt_ref[...],
                         preferred_element_type=f32)                   # (E, H)

    def step(_, carry):
        x, h = carry

        # ---- MultiHeadTripletAttention (vectorized over heads) ----
        # node projection + both node-level logit contributions in ONE matmul
        xw = jnp.dot(x, w_node_ext, preferred_element_type=f32)        # (N, HD+2H)

        # fused source-gather: x_j (HD cols) and nl_j (H cols) in one ExN pass
        gath = jnp.dot(S, xw[:, :HD + H].astype(bf16),
                       preferred_element_type=f32)                     # (E, HD+H)
        x_j = gath[:, :HD]                                             # (E, HD)
        nl_j = gath[:, HD:HD + H]                                      # (E, H)

        # target-gather of nl_i (one ExN pass, 4 output cols)
        nl_i = jnp.dot(T, xw[:, HD + H:HD + 2 * H].astype(bf16),
                       preferred_element_type=f32)                     # (E, H)

        alpha = nl_i + nl_j + edge_logit                               # (E, H)
        alpha = jnp.where(alpha > 0, alpha, negative_slope * alpha)    # leaky_relu

        # segment softmax over edges grouped by target node; per-head GLOBAL max
        # stabilizer is mathematically equivalent (and far cheaper) than per-segment.
        g_max = jnp.max(alpha, axis=0, keepdims=True)                  # (1, H)
        ex = jnp.exp(alpha - g_max)                                    # (E, H)
        exb = ex.astype(bf16)

        # UNNORMALIZED message (normalization moved to node level after scatter)
        ex_exp = jnp.dot(exb, head_exp_bf, preferred_element_type=f32) # (E, HD)
        msg_u = ex_exp * e_proj * x_j                                  # (E, HD)

        # fused scatter-add: T^T @ [msg_u | ex] -> (N, HD+H), one ExN pass
        scat_in = jnp.concatenate([msg_u, ex], axis=1).astype(bf16)    # (E, HD+H)
        scat = jax.lax.dot_general(T, scat_in, (((0,), (0,)), ((), ())),
                                   preferred_element_type=f32)         # (N, HD+H)
        aggr_u = scat[:, :HD]                                          # (N, HD)
        node_den = scat[:, HD:HD + H]                                  # (N, H)

        # node-level normalization (den[dst] is constant per segment -> identical math)
        inv_den = pl.reciprocal(node_den + 1e-16, approx=True)         # (N, H)
        inv_exp = jnp.dot(inv_den, head_exp, preferred_element_type=f32)  # (N, HD)
        aggr = aggr_u * inv_exp

        conv = jnp.dot(aggr, w_scale, preferred_element_type=f32) + bias  # (N, D)

        # ---- CELU (alpha=1) ----
        m = jnp.where(conv > 0, conv, jnp.exp(conv) - 1.0)

        # ---- fused GRU cell (seq_len == 1): one (N,2D)x(2D,4D) matmul ----
        g = jnp.dot(jnp.concatenate([m, h], axis=1), w_gru,
                    preferred_element_type=f32) + b_gru                # (N, 4D)
        r = jax.nn.sigmoid(g[:, 0:D])
        z = jax.nn.sigmoid(g[:, D:2 * D])
        n = jnp.tanh(g[:, 2 * D:3 * D] + r * g[:, 3 * D:4 * D])
        h_new = (1.0 - z) * n + z * h

        # ---- LayerNorm over D ----
        mu = jnp.mean(h_new, axis=-1, keepdims=True)
        var = jnp.mean((h_new - mu) ** 2, axis=-1, keepdims=True)
        x_new = (h_new - mu) * jax.lax.rsqrt(var + 1e-5) * gamma + beta
        return (x_new, h_new)

    x0 = x_ref[...]
    x_fin, _ = jax.lax.fori_loop(0, time_step, step, (x0, x0))
    out_ref[...] = x_fin


# ----------------------------------------------------------------------------
# Wrapper
# ----------------------------------------------------------------------------
def block_forward(x, edge_index, edge_attr, params, *, heads, time_step,
                  negative_slope=0.2):
    N, D = x.shape
    H = heads
    HD = H * D
    src, dst = edge_index[0], edge_index[1]
    # one-hot gather/scatter matrices: exact in bf16, native MXU rate
    S = jax.nn.one_hot(src, N, dtype=jnp.bfloat16)   # (E, N)
    T = jax.nn.one_hot(dst, N, dtype=jnp.bfloat16)   # (E, N)

    # Block-diagonal attention-weight matrices so the per-head "mul + sum over D"
    # logit reduction becomes matmul columns.
    w_att = params["w_att"].astype(jnp.float32)                 # (H, 3D)
    wa_i = w_att[:, 0:D].reshape(HD, 1)
    wa_e = w_att[:, D:2 * D].reshape(HD, 1)
    wa_j = w_att[:, 2 * D:3 * D].reshape(HD, 1)
    blk = jnp.repeat(jnp.eye(H, dtype=jnp.float32), D, axis=0)  # (HD, H), blk[h*D+d,h]=1
    w_natt_i = blk * wa_i                                       # (HD, H)
    w_natt_j = blk * wa_j                                       # (HD, H)
    w_eatt = blk * wa_e                                         # (HD, H)
    head_exp = blk.T                                            # (H, HD) block-ones, f32

    # fused node weight: x @ w_node_ext = [x_proj | nl_j | nl_i] in one matmul
    w_node = params["w_node"].astype(jnp.float32)               # (D, HD)
    w_node_ext = jnp.concatenate(
        [w_node, w_node @ w_natt_j, w_node @ w_natt_i], axis=1)  # (D, HD+2H)

    # fused GRU weight/bias (PyTorch gate order [r, z, n])
    w_ih = params["w_ih"].astype(jnp.float32)                   # (3D, D)
    w_hh = params["w_hh"].astype(jnp.float32)                   # (3D, D)
    b_ih = params["b_ih"].astype(jnp.float32)                   # (3D,)
    b_hh = params["b_hh"].astype(jnp.float32)                   # (3D,)
    zdd = jnp.zeros((D, D), jnp.float32)
    top = jnp.concatenate([w_ih[0:D].T, w_ih[D:2 * D].T, w_ih[2 * D:3 * D].T, zdd],
                          axis=1)                               # (D, 4D), from m
    bot = jnp.concatenate([w_hh[0:D].T, w_hh[D:2 * D].T, zdd, w_hh[2 * D:3 * D].T],
                          axis=1)                               # (D, 4D), from h
    w_gru = jnp.concatenate([top, bot], axis=0)                 # (2D, 4D)
    b_gru = jnp.concatenate(
        [b_ih[0:D] + b_hh[0:D], b_ih[D:2 * D] + b_hh[D:2 * D],
         b_ih[2 * D:3 * D], b_hh[2 * D:3 * D]]).reshape(1, 4 * D)

    operands = (
        x.astype(jnp.float32),
        edge_attr.astype(jnp.float32),
        S, T,
        w_node_ext,
        params["w_edge"].astype(jnp.float32),
        w_eatt, head_exp,
        params["w_scale"].astype(jnp.float32),
        params["bias"].reshape(1, D).astype(jnp.float32),
        w_gru, b_gru,
        params["gamma"].reshape(1, D).astype(jnp.float32),
        params["beta"].reshape(1, D).astype(jnp.float32),
    )

    # size scoped VMEM to the actual resident footprint (default 16/32 MiB is the
    # real ceiling, not physical VMEM); cap at 64 MiB so it stays legal on v7x.
    operand_bytes = sum(int(a.size) * a.dtype.itemsize for a in operands)
    vmem_limit = int(min(64 * 2**20, max(16 * 2**20, 8 * operand_bytes)))

    vmem_spec = pl.BlockSpec(memory_space=pltpu.MemorySpace.VMEM)
    kernel = functools.partial(block_kernel, time_step=time_step,
                               negative_slope=negative_slope)
    return pl.pallas_call(
        kernel,
        out_shape=jax.ShapeDtypeStruct((N, D), jnp.float32),
        in_specs=[vmem_spec] * len(operands),
        out_specs=vmem_spec,
        compiler_params=pltpu.CompilerParams(vmem_limit_bytes=vmem_limit),
    )(*operands)


# ----------------------------------------------------------------------------
# Pure-JAX reference (segment-op based, independent formulation)
# ----------------------------------------------------------------------------
def ref_forward(x, edge_index, edge_attr, p, *, heads, time_step,
                negative_slope=0.2):
    N, D = x.shape
    src, dst = edge_index[0], edge_index[1]
    e_proj = edge_attr @ p["w_edge"]
    e_ij = e_proj.reshape(-1, heads, D)
    h = x
    for _ in range(time_step):
        x_proj = x @ p["w_node"]
        xj = x_proj[src].reshape(-1, heads, D)
        xi = x_proj[dst].reshape(-1, heads, D)
        trip = jnp.concatenate([xi, e_ij, xj], axis=-1)        # (E, H, 3D)
        alpha = (trip * p["w_att"][None]).sum(-1)              # (E, H)
        alpha = jnp.where(alpha > 0, alpha, negative_slope * alpha)
        amax = jax.ops.segment_max(alpha, dst, num_segments=N)
        ex = jnp.exp(alpha - amax[dst])
        den = jax.ops.segment_sum(ex, dst, num_segments=N)
        a = ex / (den[dst] + 1e-16)
        msg = a[..., None] * e_ij * xj
        aggr = jax.ops.segment_sum(msg, dst, num_segments=N)   # (N, H, D)
        conv = aggr.reshape(N, heads * D) @ p["w_scale"] + p["bias"]
        m = jnp.where(conv > 0, conv, jnp.exp(conv) - 1.0)
        gi = m @ p["w_ih"].T + p["b_ih"]
        gh = h @ p["w_hh"].T + p["b_hh"]
        r = jax.nn.sigmoid(gi[:, :D] + gh[:, :D])
        z = jax.nn.sigmoid(gi[:, D:2 * D] + gh[:, D:2 * D])
        n = jnp.tanh(gi[:, 2 * D:] + r * gh[:, 2 * D:])
        h = (1 - z) * n + z * h
        mu = h.mean(-1, keepdims=True)
        var = ((h - mu) ** 2).mean(-1, keepdims=True)
        x = (h - mu) / jnp.sqrt(var + 1e-5) * p["gamma"] + p["beta"]
    return x


# ----------------------------------------------------------------------------
# Deterministic parameter init (shapes from the PyTorch module)
# ----------------------------------------------------------------------------
def init_params(key, dim, edge_dim, heads):
    ks = jax.random.split(key, 8)

    def uni(k, shape, fan_in):
        b = math.sqrt(6.0 / fan_in)
        return jax.random.uniform(k, shape, jnp.float32, -b, b)

    gru_b = 1.0 / math.sqrt(dim)
    return {
        "w_node": uni(ks[0], (dim, heads * dim), dim),
        "w_edge": uni(ks[1], (edge_dim, heads * dim), edge_dim),
        "w_att": uni(ks[2], (heads, 3 * dim), 3 * dim),   # squeezed (1,H,3D)
        "w_scale": uni(ks[3], (heads * dim, dim), heads * dim),
        "bias": jnp.zeros((dim,), jnp.float32),
        "w_ih": jax.random.uniform(ks[4], (3 * dim, dim), jnp.float32, -gru_b, gru_b),
        "w_hh": jax.random.uniform(ks[5], (3 * dim, dim), jnp.float32, -gru_b, gru_b),
        "b_ih": jax.random.uniform(ks[6], (3 * dim,), jnp.float32, -gru_b, gru_b),
        "b_hh": jax.random.uniform(ks[7], (3 * dim,), jnp.float32, -gru_b, gru_b),
        "gamma": jnp.ones((dim,), jnp.float32),
        "beta": jnp.zeros((dim,), jnp.float32),
    }


if __name__ == "__main__":
    N, D, E, EDGE_DIM, HEADS, TIME_STEP = 8, 32, 16, 8, 4, 3

    key = jax.random.PRNGKey(0)
    k_x, k_e, k_s, k_d, k_p = jax.random.split(key, 5)
    x = jax.random.normal(k_x, (N, D), jnp.float32)
    edge_attr = jax.random.normal(k_e, (E, EDGE_DIM), jnp.float32)
    src = jax.random.randint(k_s, (E,), 0, N)
    dst = jax.random.randint(k_d, (E,), 0, N)
    edge_index = jnp.stack([src, dst])            # (2, E), PyG convention

    params = init_params(k_p, D, EDGE_DIM, HEADS)

    out = block_forward(x, edge_index, edge_attr, params,
                        heads=HEADS, time_step=TIME_STEP)
    out = jax.block_until_ready(out)

    ref = ref_forward(x, edge_index, edge_attr, params,
                      heads=HEADS, time_step=TIME_STEP)
    ref = jax.block_until_ready(ref)

    assert out.shape == (N, D)
    assert bool(jnp.all(jnp.isfinite(out)))
    # tolerance covers bf16 inputs to the one-hot MXU gathers/scatters plus the
    # EUP approximate reciprocal in the softmax normalization
    assert bool(jnp.allclose(out, ref, atol=3e-2, rtol=3e-2)), (
        f"max abs diff {float(jnp.max(jnp.abs(out - ref)))}")

    print("KERNEL_OK")
</pallas_src>

<mosaic_0001>
module attributes {stable_mosaic.version = 11 : i64} {
  func.func @block_kernel(%arg0: memref<8x32xf32, #tpu.memory_space<vmem>>, %arg1: memref<16x8xf32, #tpu.memory_space<vmem>>, %arg2: memref<16x8xbf16, #tpu.memory_space<vmem>>, %arg3: memref<16x8xbf16, #tpu.memory_space<vmem>>, %arg4: memref<32x136xf32, #tpu.memory_space<vmem>>, %arg5: memref<8x128xf32, #tpu.memory_space<vmem>>, %arg6: memref<128x4xf32, #tpu.memory_space<vmem>>, %arg7: memref<4x128xf32, #tpu.memory_space<vmem>>, %arg8: memref<128x32xf32, #tpu.memory_space<vmem>>, %arg9: memref<1x32xf32, #tpu.memory_space<vmem>>, %arg10: memref<64x128xf32, #tpu.memory_space<vmem>>, %arg11: memref<1x128xf32, #tpu.memory_space<vmem>>, %arg12: memref<1x32xf32, #tpu.memory_space<vmem>>, %arg13: memref<1x32xf32, #tpu.memory_space<vmem>>, %arg14: memref<8x32xf32, #tpu.memory_space<vmem>>) attributes {dimension_semantics = [], scalar_prefetch = 0 : i64, scratch_operands = 0 : i64, tpu.core_type = #tpu.core_type<tc>} {
    %c0 = arith.constant 0 : index
    %c0_0 = arith.constant 0 : index
    %0 = vector.load %arg2[%c0, %c0_0] : memref<16x8xbf16, #tpu.memory_space<vmem>>, vector<16x8xbf16>
    %c0_1 = arith.constant 0 : index
    %c0_2 = arith.constant 0 : index
    %1 = vector.load %arg3[%c0_1, %c0_2] : memref<16x8xbf16, #tpu.memory_space<vmem>>, vector<16x8xbf16>
    %c0_3 = arith.constant 0 : index
    %c0_4 = arith.constant 0 : index
    %2 = vector.load %arg4[%c0_3, %c0_4] : memref<32x136xf32, #tpu.memory_space<vmem>>, vector<32x136xf32>
    %c0_5 = arith.constant 0 : index
    %c0_6 = arith.constant 0 : index
    %3 = vector.load %arg7[%c0_5, %c0_6] : memref<4x128xf32, #tpu.memory_space<vmem>>, vector<4x128xf32>
    %4 = arith.truncf %3 : vector<4x128xf32> to vector<4x128xbf16>
    %c0_7 = arith.constant 0 : index
    %c0_8 = arith.constant 0 : index
    %5 = vector.load %arg8[%c0_7, %c0_8] : memref<128x32xf32, #tpu.memory_space<vmem>>, vector<128x32xf32>
    %c0_9 = arith.constant 0 : index
    %c0_10 = arith.constant 0 : index
    %6 = vector.load %arg10[%c0_9, %c0_10] : memref<64x128xf32, #tpu.memory_space<vmem>>, vector<64x128xf32>
    %c0_11 = arith.constant 0 : index
    %c0_12 = arith.constant 0 : index
    %7 = vector.load %arg9[%c0_11, %c0_12] : memref<1x32xf32, #tpu.memory_space<vmem>>, vector<1x32xf32>
    %8 = vector.shape_cast %7 : vector<1x32xf32> to vector<1x32xf32>
    %9 = vector.broadcast %8 : vector<1x32xf32> to vector<8x32xf32>
    %c0_13 = arith.constant 0 : index
    %c0_14 = arith.constant 0 : index
    %10 = vector.load %arg11[%c0_13, %c0_14] : memref<1x128xf32, #tpu.memory_space<vmem>>, vector<1x128xf32>
    %11 = vector.shape_cast %10 : vector<1x128xf32> to vector<1x128xf32>
    %12 = vector.broadcast %11 : vector<1x128xf32> to vector<8x128xf32>
    %c0_15 = arith.constant 0 : index
    %c0_16 = arith.constant 0 : index
    %13 = vector.load %arg12[%c0_15, %c0_16] : memref<1x32xf32, #tpu.memory_space<vmem>>, vector<1x32xf32>
    %14 = vector.shape_cast %13 : vector<1x32xf32> to vector<1x32xf32>
    %15 = vector.broadcast %14 : vector<1x32xf32> to vector<8x32xf32>
    %c0_17 = arith.constant 0 : index
    %c0_18 = arith.constant 0 : index
    %16 = vector.load %arg13[%c0_17, %c0_18] : memref<1x32xf32, #tpu.memory_space<vmem>>, vector<1x32xf32>
    %17 = vector.shape_cast %16 : vector<1x32xf32> to vector<1x32xf32>
    %18 = vector.broadcast %17 : vector<1x32xf32> to vector<8x32xf32>
    %c0_19 = arith.constant 0 : index
    %c0_20 = arith.constant 0 : index
    %19 = vector.load %arg1[%c0_19, %c0_20] : memref<16x8xf32, #tpu.memory_space<vmem>>, vector<16x8xf32>
    %c0_21 = arith.constant 0 : index
    %c0_22 = arith.constant 0 : index
    %20 = vector.load %arg5[%c0_21, %c0_22] : memref<8x128xf32, #tpu.memory_space<vmem>>, vector<8x128xf32>
    %cst = arith.constant dense<0.000000e+00> : vector<16x128xf32>
    %21 = tpu.matmul %19, %20, %cst {dimension_numbers = #tpu.dot_dimension_numbers<[1], [0], [0], [1], [0, 0, 1, 1], [], []>} : vector<16x8xf32>, vector<8x128xf32>, vector<16x128xf32> -> vector<16x128xf32>
    %c0_23 = arith.constant 0 : index
    %c0_24 = arith.constant 0 : index
    %22 = vector.load %arg6[%c0_23, %c0_24] : memref<128x4xf32, #tpu.memory_space<vmem>>, vector<128x4xf32>
    %cst_25 = arith.constant dense<0.000000e+00> : vector<16x4xf32>
    %23 = tpu.matmul %21, %22, %cst_25 {dimension_numbers = #tpu.dot_dimension_numbers<[1], [0], [0], [1], [0, 0, 1, 1], [], []>} : vector<16x128xf32>, vector<128x4xf32>, vector<16x4xf32> -> vector<16x4xf32>
    %c0_26 = arith.constant 0 : index
    %c0_27 = arith.constant 0 : index
    %24 = vector.load %arg0[%c0_26, %c0_27] : memref<8x32xf32, #tpu.memory_space<vmem>>, vector<8x32xf32>
    %c0_i32 = arith.constant 0 : i32
    %c3_i32 = arith.constant 3 : i32
    %25 = arith.addi %c0_i32, %c3_i32 : i32
    %c1_i32 = arith.constant 1 : i32
    %26:2 = scf.for %arg15 = %c0_i32 to %25 step %c1_i32 iter_args(%arg16 = %24, %arg17 = %24) -> (vector<8x32xf32>, vector<8x32xf32>)  : i32 {
      %cst_30 = arith.constant dense<0.000000e+00> : vector<8x136xf32>
      %28 = tpu.matmul %arg16, %2, %cst_30 {dimension_numbers = #tpu.dot_dimension_numbers<[1], [0], [0], [1], [0, 0, 1, 1], [], []>} : vector<8x32xf32>, vector<32x136xf32>, vector<8x136xf32> -> vector<8x136xf32>
      %29 = vector.extract_strided_slice %28 {offsets = [0, 0], sizes = [8, 132], strides = [1, 1]} : vector<8x136xf32> to vector<8x132xf32>
      %30 = arith.truncf %29 : vector<8x132xf32> to vector<8x132xbf16>
      %cst_31 = arith.constant dense<0.000000e+00> : vector<16x132xf32>
      %31 = tpu.matmul %0, %30, %cst_31 {dimension_numbers = #tpu.dot_dimension_numbers<[1], [0], [0], [1], [0, 0, 1, 1], [], []>} : vector<16x8xbf16>, vector<8x132xbf16>, vector<16x132xf32> -> vector<16x132xf32>
      %32 = vector.extract_strided_slice %31 {offsets = [0, 0], sizes = [16, 128], strides = [1, 1]} : vector<16x132xf32> to vector<16x128xf32>
      %33 = vector.extract_strided_slice %31 {offsets = [0, 128], sizes = [16, 4], strides = [1, 1]} : vector<16x132xf32> to vector<16x4xf32>
      %34 = vector.extract_strided_slice %28 {offsets = [0, 132], sizes = [8, 4], strides = [1, 1]} : vector<8x136xf32> to vector<8x4xf32>
      %35 = arith.truncf %34 : vector<8x4xf32> to vector<8x4xbf16>
      %cst_32 = arith.constant dense<0.000000e+00> : vector<16x4xf32>
      %36 = tpu.matmul %1, %35, %cst_32 {dimension_numbers = #tpu.dot_dimension_numbers<[1], [0], [0], [1], [0, 0, 1, 1], [], []>} : vector<16x8xbf16>, vector<8x4xbf16>, vector<16x4xf32> -> vector<16x4xf32>
      %37 = arith.addf %36, %33 : vector<16x4xf32>
      %38 = arith.addf %37, %23 : vector<16x4xf32>
      %cst_33 = arith.constant 0.000000e+00 : f32
      %39 = vector.broadcast %cst_33 : f32 to vector<16x4xf32>
      %40 = arith.cmpf ogt, %38, %39 : vector<16x4xf32>
      %cst_34 = arith.constant 2.000000e-01 : f32
      %41 = vector.broadcast %cst_34 : f32 to vector<16x4xf32>
      %42 = arith.mulf %41, %38 : vector<16x4xf32>
      %43 = arith.select %40, %38, %42 : vector<16x4xi1>, vector<16x4xf32>
      %cst_35 = arith.constant dense<0xFF800000> : vector<4xf32>
      %44 = vector.multi_reduction <maximumf>, %43, %cst_35 [0] : vector<16x4xf32> to vector<4xf32>
      %45 = vector.shape_cast %44 : vector<4xf32> to vector<1x4xf32>
      %46 = vector.broadcast %45 : vector<1x4xf32> to vector<16x4xf32>
      %47 = arith.subf %43, %46 : vector<16x4xf32>
      %48 = math.exp %47 : vector<16x4xf32>
      %49 = arith.truncf %48 : vector<16x4xf32> to vector<16x4xbf16>
      %cst_36 = arith.constant dense<0.000000e+00> : vector<16x128xf32>
      %50 = tpu.matmul %49, %4, %cst_36 {dimension_numbers = #tpu.dot_dimension_numbers<[1], [0], [0], [1], [0, 0, 1, 1], [], []>} : vector<16x4xbf16>, vector<4x128xbf16>, vector<16x128xf32> -> vector<16x128xf32>
      %51 = arith.mulf %50, %21 : vector<16x128xf32>
      %52 = arith.mulf %51, %32 : vector<16x128xf32>
      %53 = tpu.concatenate %52, %48 in 1 : vector<16x128xf32>, vector<16x4xf32> -> vector<16x132xf32>
      %54 = arith.truncf %53 : vector<16x132xf32> to vector<16x132xbf16>
      %cst_37 = arith.constant dense<0.000000e+00> : vector<8x132xf32>
      %55 = tpu.matmul %1, %54, %cst_37 {dimension_numbers = #tpu.dot_dimension_numbers<[0], [0], [1], [1], [0, 1, 1, 1], [], []>} : vector<16x8xbf16>, vector<16x132xbf16>, vector<8x132xf32> -> vector<8x132xf32>
      %56 = vector.extract_strided_slice %55 {offsets = [0, 0], sizes = [8, 128], strides = [1, 1]} : vector<8x132xf32> to vector<8x128xf32>
      %57 = vector.extract_strided_slice %55 {offsets = [0, 128], sizes = [8, 4], strides = [1, 1]} : vector<8x132xf32> to vector<8x4xf32>
      %cst_38 = arith.constant 1.000000e-16 : f32
      %58 = vector.broadcast %cst_38 : f32 to vector<8x4xf32>
      %59 = arith.addf %57, %58 : vector<8x4xf32>
      %60 = tpu.reciprocal %59 {approx = true} : vector<8x4xf32> -> vector<8x4xf32>
      %cst_39 = arith.constant dense<0.000000e+00> : vector<8x128xf32>
      %61 = tpu.matmul %60, %3, %cst_39 {dimension_numbers = #tpu.dot_dimension_numbers<[1], [0], [0], [1], [0, 0, 1, 1], [], []>} : vector<8x4xf32>, vector<4x128xf32>, vector<8x128xf32> -> vector<8x128xf32>
      %62 = arith.mulf %56, %61 : vector<8x128xf32>
      %cst_40 = arith.constant dense<0.000000e+00> : vector<8x32xf32>
      %63 = tpu.matmul %62, %5, %cst_40 {dimension_numbers = #tpu.dot_dimension_numbers<[1], [0], [0], [1], [0, 0, 1, 1], [], []>} : vector<8x128xf32>, vector<128x32xf32>, vector<8x32xf32> -> vector<8x32xf32>
      %64 = arith.addf %63, %9 : vector<8x32xf32>
      %cst_41 = arith.constant 0.000000e+00 : f32
      %65 = vector.broadcast %cst_41 : f32 to vector<8x32xf32>
      %66 = arith.cmpf ogt, %64, %65 : vector<8x32xf32>
      %67 = math.exp %64 : vector<8x32xf32>
      %cst_42 = arith.constant 1.000000e+00 : f32
      %68 = vector.broadcast %cst_42 : f32 to vector<8x32xf32>
      %69 = arith.subf %67, %68 : vector<8x32xf32>
      %70 = arith.select %66, %64, %69 : vector<8x32xi1>, vector<8x32xf32>
      %71 = tpu.concatenate %70, %arg17 in 1 : vector<8x32xf32>, vector<8x32xf32> -> vector<8x64xf32>
      %cst_43 = arith.constant dense<0.000000e+00> : vector<8x128xf32>
      %72 = tpu.matmul %71, %6, %cst_43 {dimension_numbers = #tpu.dot_dimension_numbers<[1], [0], [0], [1], [0, 0, 1, 1], [], []>} : vector<8x64xf32>, vector<64x128xf32>, vector<8x128xf32> -> vector<8x128xf32>
      %73 = arith.addf %72, %12 : vector<8x128xf32>
      %74 = vector.extract_strided_slice %73 {offsets = [0, 0], sizes = [8, 32], strides = [1, 1]} : vector<8x128xf32> to vector<8x32xf32>
      %75 = arith.negf %74 : vector<8x32xf32>
      %76 = math.exp %75 : vector<8x32xf32>
      %cst_44 = arith.constant 1.000000e+00 : f32
      %77 = vector.broadcast %cst_44 : f32 to vector<8x32xf32>
      %78 = arith.addf %77, %76 : vector<8x32xf32>
      %79 = arith.divf %77, %78 : vector<8x32xf32>
      %80 = vector.extract_strided_slice %73 {offsets = [0, 32], sizes = [8, 32], strides = [1, 1]} : vector<8x128xf32> to vector<8x32xf32>
      %81 = arith.negf %80 : vector<8x32xf32>
      %82 = math.exp %81 : vector<8x32xf32>
      %cst_45 = arith.constant 1.000000e+00 : f32
      %83 = vector.broadcast %cst_45 : f32 to vector<8x32xf32>
      %84 = arith.addf %83, %82 : vector<8x32xf32>
      %85 = arith.divf %83, %84 : vector<8x32xf32>
      %86 = vector.extract_strided_slice %73 {offsets = [0, 64], sizes = [8, 32], strides = [1, 1]} : vector<8x128xf32> to vector<8x32xf32>
      %87 = vector.extract_strided_slice %73 {offsets = [0, 96], sizes = [8, 32], strides = [1, 1]} : vector<8x128xf32> to vector<8x32xf32>
      %88 = arith.mulf %79, %87 : vector<8x32xf32>
      %89 = arith.addf %86, %88 : vector<8x32xf32>
      %90 = math.tanh %89 : vector<8x32xf32>
      %cst_46 = arith.constant 1.000000e+00 : f32
      %91 = vector.broadcast %cst_46 : f32 to vector<8x32xf32>
      %92 = arith.subf %91, %85 : vector<8x32xf32>
      %93 = arith.mulf %92, %90 : vector<8x32xf32>
      %94 = arith.mulf %85, %arg17 : vector<8x32xf32>
      %95 = arith.addf %93, %94 : vector<8x32xf32>
      %cst_47 = arith.constant dense<0.000000e+00> : vector<8xf32>
      %96 = vector.multi_reduction <add>, %95, %cst_47 [1] : vector<8x32xf32> to vector<8xf32>
      %97 = vector.shape_cast %96 : vector<8xf32> to vector<8x1xf32>
      %cst_48 = arith.constant 3.200000e+01 : f32
      %98 = vector.broadcast %cst_48 : f32 to vector<8x1xf32>
      %99 = arith.divf %97, %98 : vector<8x1xf32>
      %100 = vector.broadcast %99 : vector<8x1xf32> to vector<8x32xf32>
      %101 = arith.subf %95, %100 : vector<8x32xf32>
      %102 = arith.mulf %101, %101 : vector<8x32xf32>
      %cst_49 = arith.constant dense<0.000000e+00> : vector<8xf32>
      %103 = vector.multi_reduction <add>, %102, %cst_49 [1] : vector<8x32xf32> to vector<8xf32>
      %104 = vector.shape_cast %103 : vector<8xf32> to vector<8x1xf32>
      %cst_50 = arith.constant 3.200000e+01 : f32
      %105 = vector.broadcast %cst_50 : f32 to vector<8x1xf32>
      %106 = arith.divf %104, %105 : vector<8x1xf32>
      %107 = vector.broadcast %99 : vector<8x1xf32> to vector<8x32xf32>
      %108 = arith.subf %95, %107 : vector<8x32xf32>
      %cst_51 = arith.constant 9.99999974E-6 : f32
      %109 = vector.broadcast %cst_51 : f32 to vector<8x1xf32>
      %110 = arith.addf %106, %109 : vector<8x1xf32>
      %111 = math.rsqrt %110 : vector<8x1xf32>
      %112 = vector.broadcast %111 : vector<8x1xf32> to vector<8x32xf32>
      %113 = arith.mulf %108, %112 : vector<8x32xf32>
      %114 = arith.mulf %113, %15 : vector<8x32xf32>
      %115 = arith.addf %114, %18 : vector<8x32xf32>
      scf.yield %115, %95 : vector<8x32xf32>, vector<8x32xf32>
    }
    %c0_28 = arith.constant 0 : index
    %c0_29 = arith.constant 0 : index
    %27 = vector.load %arg14[%c0_28, %c0_29] : memref<8x32xf32, #tpu.memory_space<vmem>>, vector<8x32xf32>
    tpu.vector_store %arg14[%c0_28, %c0_29], %26#0 {strides = array<i32>} : memref<8x32xf32, #tpu.memory_space<vmem>>, vector<8x32xf32>,
    return
  }
}

</mosaic_0001>

<llo_original>
// kernel: tpu_custom_call.1
$region0: #{tpu_custom_call.1}
  #allocation0 [shape = 'u32[]', space=smem, size = 0x4, offset = 0x4, fixed_abs, tag = 'smem constant byte address 0x4 - core index']
  #allocation1 [shape = 'u32[144,128]{1,0:T(1,128)}', space=vmem, size = 0x12000, scoped, tag = 'internal scratch']
  %s0 = inlined_call_operand.vmem [shape: f32[8,32], index: 0, kind: input, shape index: {}]
  %s1 = inlined_call_operand.vmem [shape: f32[16,8], index: 1, kind: input, shape index: {}]
  %s2 = inlined_call_operand.vmem [shape: bf16[16,8], index: 2, kind: input, shape index: {}]
  %s3 = inlined_call_operand.vmem [shape: bf16[16,8], index: 3, kind: input, shape index: {}]
  %s4 = inlined_call_operand.vmem [shape: f32[32,136], index: 4, kind: input, shape index: {}]
  %s5 = inlined_call_operand.vmem [shape: f32[8,128], index: 5, kind: input, shape index: {}]
  %s6 = inlined_call_operand.vmem [shape: f32[128,4], index: 6, kind: input, shape index: {}]
  %s7 = inlined_call_operand.vmem [shape: f32[4,128], index: 7, kind: input, shape index: {}]
  %s8 = inlined_call_operand.vmem [shape: f32[128,32], index: 8, kind: input, shape index: {}]
  %s9 = inlined_call_operand.vmem [shape: f32[1,32], index: 9, kind: input, shape index: {}]
  %s10 = inlined_call_operand.vmem [shape: f32[64,128], index: 10, kind: input, shape index: {}]
  %s11 = inlined_call_operand.vmem [shape: f32[1,128], index: 11, kind: input, shape index: {}]
  %s12 = inlined_call_operand.vmem [shape: f32[1,32], index: 12, kind: input, shape index: {}]
  %s13 = inlined_call_operand.vmem [shape: f32[1,32], index: 13, kind: input, shape index: {}]
  %s14 = inlined_call_operand.hbm [shape: f32[8,32], index: 14, kind: output, shape index: {}]
  %s15 = sld [smem:[#allocation0]]
  $region73: #{tpu_custom_call.1} parent=0
    _
  %s17 = ssub.s32 1, %s15
  %s18 = scalar_select 0, %s17, %s15
  $region1: #{tpu_custom_call.1} parent=0
    #allocation2 [shape = 'u8[4096]{0}', space=vmem, size = 0x1000, scoped, tag = 'output window, operand 0, single buffered']
    #allocation3 [shape = 's32[1]{0}', space=sflag, size = 0x4, scoped, tag = 'scoped memory for tpu_custom_call.1']
    %19 = vsyncpa [#allocation3], 0
    // Predicated region
    $region2: #{tpu_custom_call.1} parent=1 // pred_check
      _
    $region3: #{tpu_custom_call.1} parent=1 // pred_check_branch
      %21 = sbr.rel (0) target = $region5
    $region4: #{tpu_custom_call.1} parent=1 // pred_region
      _
    $region5: #{tpu_custom_call.1} parent=1 // pred_fallthru
      _
    // Predicated region
    $region6: #{tpu_custom_call.1} parent=1 // pred_check
      _
    $region7: #{tpu_custom_call.1} parent=1 // pred_check_branch
      %23 = sbr.rel (0) target = $region9
    $region8: #{tpu_custom_call.1} parent=1 // pred_region
      _
    $region9: #{tpu_custom_call.1} parent=1 // pred_fallthru
      _
    // Predicated region
    $region10: #{tpu_custom_call.1} parent=1 // pred_check
      _
    $region11: #{tpu_custom_call.1} parent=1 // pred_check_branch
      %25 = sbr.rel (0) target = $region13
    $region12: #{tpu_custom_call.1} parent=1 // pred_region
      _
    $region13: #{tpu_custom_call.1} parent=1 // pred_fallthru
      _
    // Predicated region
    $region14: #{tpu_custom_call.1} parent=1 // pred_check
      _
    $region15: #{tpu_custom_call.1} parent=1 // pred_check_branch
      %27 = sbr.rel (0) target = $region17
    $region16: #{tpu_custom_call.1} parent=1 // pred_region
      _
    $region17: #{tpu_custom_call.1} parent=1 // pred_fallthru
      _
    // Predicated region
    $region18: #{tpu_custom_call.1} parent=1 // pred_check
      _
    $region19: #{tpu_custom_call.1} parent=1 // pred_check_branch
      %29 = sbr.rel (0) target = $region21
    $region20: #{tpu_custom_call.1} parent=1 // pred_region
      _
    $region21: #{tpu_custom_call.1} parent=1 // pred_fallthru
      _
    // Predicated region
    $region22: #{tpu_custom_call.1} parent=1 // pred_check
      _
    $region23: #{tpu_custom_call.1} parent=1 // pred_check_branch
      %31 = sbr.rel (0) target = $region25
    $region24: #{tpu_custom_call.1} parent=1 // pred_region
      _
    $region25: #{tpu_custom_call.1} parent=1 // pred_fallthru
      _
    // Predicated region
    $region26: #{tpu_custom_call.1} parent=1 // pred_check
      _
    $region27: #{tpu_custom_call.1} parent=1 // pred_check_branch
      %33 = sbr.rel (0) target = $region29
    $region28: #{tpu_custom_call.1} parent=1 // pred_region
      _
    $region29: #{tpu_custom_call.1} parent=1 // pred_fallthru
      _
    // Predicated region
    $region30: #{tpu_custom_call.1} parent=1 // pred_check
      _
    $region31: #{tpu_custom_call.1} parent=1 // pred_check_branch
      %35 = sbr.rel (0) target = $region33
    $region32: #{tpu_custom_call.1} parent=1 // pred_region
      _
    $region33: #{tpu_custom_call.1} parent=1 // pred_fallthru
      _
    // Predicated region
    $region34: #{tpu_custom_call.1} parent=1 // pred_check
      _
    $region35: #{tpu_custom_call.1} parent=1 // pred_check_branch
      %37 = sbr.rel (0) target = $region37
    $region36: #{tpu_custom_call.1} parent=1 // pred_region
      _
    $region37: #{tpu_custom_call.1} parent=1 // pred_fallthru
      _
    // Predicated region
    $region38: #{tpu_custom_call.1} parent=1 // pred_check
      _
    $region39: #{tpu_custom_call.1} parent=1 // pred_check_branch
      %39 = sbr.rel (0) target = $region41
    $region40: #{tpu_custom_call.1} parent=1 // pred_region
      _
    $region41: #{tpu_custom_call.1} parent=1 // pred_fallthru
      _
    // Predicated region
    $region42: #{tpu_custom_call.1} parent=1 // pred_check
      _
    $region43: #{tpu_custom_call.1} parent=1 // pred_check_branch
      %41 = sbr.rel (0) target = $region45
    $region44: #{tpu_custom_call.1} parent=1 // pred_region
      _
    $region45: #{tpu_custom_call.1} parent=1 // pred_fallthru
      _
    // Predicated region
    $region46: #{tpu_custom_call.1} parent=1 // pred_check
      _
    $region47: #{tpu_custom_call.1} parent=1 // pred_check_branch
      %43 = sbr.rel (0) target = $region49
    $region48: #{tpu_custom_call.1} parent=1 // pred_region
      _
    $region49: #{tpu_custom_call.1} parent=1 // pred_fallthru
      _
    // Predicated region
    $region50: #{tpu_custom_call.1} parent=1 // pred_check
      _
    $region51: #{tpu_custom_call.1} parent=1 // pred_check_branch
      %45 = sbr.rel (0) target = $region53
    $region52: #{tpu_custom_call.1} parent=1 // pred_region
      _
    $region53: #{tpu_custom_call.1} parent=1 // pred_fallthru
      _
    // Predicated region
    $region54: #{tpu_custom_call.1} parent=1 // pred_check
      _
    $region55: #{tpu_custom_call.1} parent=1 // pred_check_branch
      %47 = sbr.rel (0) target = $region57
    $region56: #{tpu_custom_call.1} parent=1 // pred_region
      _
    $region57: #{tpu_custom_call.1} parent=1 // pred_fallthru
      _
    %v49 = vld [vmem:[%s2] sm:$0xf]
    %v50 = vld [vmem:[%s2 + $0x4] sm:$0xf]
    %v51 = vld [vmem:[%s3] sm:$0xf]
    %v52 = vld [vmem:[%s3 + $0x4] sm:$0xf]
    %v53 = vld [vmem:[%s4] sm:$0xff]
    %v54 = vld [vmem:[%s4 + $0x8] sm:$0xff]
    %v55 = vld [vmem:[%s4 + $0x10] sm:$0xff]
    %v56 = vld [vmem:[%s4 + $0x18] sm:$0xff]
    %v57 = vld [vmem:[%s4 + $0x20] sm:$0xff]
    %v58 = vld [vmem:[%s4 + $0x28] sm:$0xff]
    %v59 = vld [vmem:[%s4 + $0x30] sm:$0xff]
    %v60 = vld [vmem:[%s4 + $0x38] sm:$0xff]
    %v61 = vld [vmem:[%s7] sm:$0xf]
    %v62 = vpack.c.bf16 %v61, %v61
    %v63 = vld [vmem:[%s8] sm:$0xff]
    %v64 = vld [vmem:[%s8 + $0x8] sm:$0xff]
    %v65 = vld [vmem:[%s8 + $0x10] sm:$0xff]
    %v66 = vld [vmem:[%s8 + $0x18] sm:$0xff]
    %v67 = vld [vmem:[%s8 + $0x20] sm:$0xff]
    %v68 = vld [vmem:[%s8 + $0x28] sm:$0xff]
    %v69 = vld [vmem:[%s8 + $0x30] sm:$0xff]
    %v70 = vld [vmem:[%s8 + $0x38] sm:$0xff]
    %v71 = vld [vmem:[%s8 + $0x40] sm:$0xff]
    %v72 = vld [vmem:[%s8 + $0x48] sm:$0xff]
    %v73 = vld [vmem:[%s8 + $0x50] sm:$0xff]
    %v74 = vld [vmem:[%s8 + $0x58] sm:$0xff]
    %v75 = vld [vmem:[%s8 + $0x60] sm:$0xff]
    %v76 = vld [vmem:[%s8 + $0x68] sm:$0xff]
    %v77 = vld [vmem:[%s8 + $0x70] sm:$0xff]
    %v78 = vld [vmem:[%s8 + $0x78] sm:$0xff]
    %v79 = vld [vmem:[%s10] sm:$0xff]
    %v80 = vld [vmem:[%s10 + $0x8] sm:$0xff]
    %v81 = vld [vmem:[%s10 + $0x10] sm:$0xff]
    %v82 = vld [vmem:[%s10 + $0x18] sm:$0xff]
    %v83 = vld [vmem:[%s10 + $0x20] sm:$0xff]
    %v84 = vld [vmem:[%s10 + $0x28] sm:$0xff]
    %v85 = vld [vmem:[%s10 + $0x30] sm:$0xff]
    %v86 = vld [vmem:[%s10 + $0x38] sm:$0xff]
    %v87 = vld [vmem:[%s9] sm:$0x1]
    %v89 = vlaneseq
    %v90 = vshrl.u32 %v89, 7
    %v91 = vsub.s32 0, %v90
    %v92 = vrot.slane %v87, %v91
    %v94 = vld [vmem:[%s11] sm:$0x1]
    %v96 = vlaneseq
    %v97 = vshrl.u32 %v96, 7
    %v98 = vsub.s32 0, %v97
    %v99 = vrot.slane %v94, %v98
    %v101 = vld [vmem:[%s12] sm:$0x1]
    %v103 = vlaneseq
    %v104 = vshrl.u32 %v103, 7
    %v105 = vsub.s32 0, %v104
    %v106 = vrot.slane %v101, %v105
    %v107 = vld [vmem:[%s13] sm:$0x1]
    %v109 = vlaneseq
    %v110 = vshrl.u32 %v109, 7
    %v111 = vsub.s32 0, %v110
    %v112 = vrot.slane %v107, %v111
    %v113 = vld [vmem:[%s1] sm:$0xff]
    %v114 = vld [vmem:[%s1 + $0x8] sm:$0xff]
    %v115 = vld [vmem:[%s5] sm:$0xff]
    %vm116 = vcmask 64512
    %v118 = vsel %vm116, %v113, 0
    %v121 = vsel %vm116, %v114, 0
    %123 = vmatprep.subr.mxu0 0.0
    %124 = vmatpush1.msra.mxu0 %v115
    %125 = vmatprep.subr.mxu0 0.0
    %126 = vmatpush1.msra.mxu0 0.0
    %127 = vmatprep.subr.mxu0 0.0
    %128 = vmatpush1.msra.mxu0 0.0
    %129 = vmatprep.subr.mxu0 0.0
    %130 = vmatpush1.msra.mxu0 0.0
    %131 = vmatprep.subr.mxu0 0.0
    %132 = vmatpush1.msra.mxu0 0.0
    %133 = vmatprep.subr.mxu0 0.0
    %134 = vmatpush1.msra.mxu0 0.0
    %135 = vmatprep.subr.mxu0 0.0
    %136 = vmatpush1.msra.mxu0 0.0
    %137 = vmatprep.subr.mxu0 0.0
    %138 = vmatpush1.msra.mxu0 0.0
    %139 = vmatprep.subr.mxu0 0.0
    %140 = vmatpush1.msra.mxu0 0.0
    %141 = vmatprep.subr.mxu0 0.0
    %142 = vmatpush1.msra.mxu0 0.0
    %143 = vmatprep.subr.mxu0 0.0
    %144 = vmatpush1.msra.mxu0 0.0
    %145 = vmatprep.subr.mxu0 0.0
    %146 = vmatpush1.msra.mxu0 0.0
    %147 = vmatprep.subr.mxu0 0.0
    %148 = vmatpush1.msra.mxu0 0.0
    %149 = vmatprep.subr.mxu0 0.0
    %150 = vmatpush1.msra.mxu0 0.0
    %151 = vmatprep.subr.mxu0 0.0
    %152 = vmatpush1.msra.mxu0 0.0
    %153 = vmatprep.subr.mxu0 0.0
    %154 = vmatpush1.msra.mxu0 0.0
    %155 = vmatprep.subr.mxu0 0.0
    %156 = vmatpush1.msra.mxu0 0.0
    %157 = vmatprep.subr.mxu0 0.0
    %158 = vmatpush1.msra.mxu0 0.0
    %159 = vmatprep.subr.mxu0 0.0
    %160 = vmatpush1.msra.mxu0 0.0
    %161 = vmatprep.subr.mxu0 0.0
    %162 = vmatpush1.msra.mxu0 0.0
    %163 = vmatprep.subr.mxu0 0.0
    %164 = vmatpush1.msra.mxu0 0.0
    %165 = vmatprep.subr.mxu0 0.0
    %166 = vmatpush1.msra.mxu0 0.0
    %167 = vmatprep.subr.mxu0 0.0
    %168 = vmatpush1.msra.mxu0 0.0
    %169 = vmatprep.subr.mxu0 0.0
    %170 = vmatpush1.msra.mxu0 0.0
    %171 = vmatprep.subr.mxu0 0.0
    %172 = vmatpush1.msra.mxu0 0.0
    %173 = vmatprep.subr.mxu0 0.0
    %174 = vmatpush1.msra.mxu0 0.0
    %175 = vmatprep.subr.mxu0 0.0
    %176 = vmatpush1.msra.mxu0 0.0
    %177 = vmatprep.subr.mxu0 0.0
    %178 = vmatpush1.msra.mxu0 0.0
    %179 = vmatprep.subr.mxu0 0.0
    %180 = vmatpush1.msra.mxu0 0.0
    %181 = vmatprep.subr.mxu0 0.0
    %182 = vmatpush1.msra.mxu0 0.0
    %183 = vmatprep.subr.mxu0 0.0
    %184 = vmatpush1.msra.mxu0 0.0
    %185 = vmatprep.subr.mxu0 0.0
    %186 = vmatpush1.msra.mxu0 0.0
    %187 = vmatprep.mubr.f32.mxu0 0.0
    %188 = vmatmul.mubr.f32.gmra.mrb[0].mxu0 %v118
    %v189 = vpop.f32.mrb[0].mxu0
    %v190 = vadd.f32 0.0, %v189
    %v191 = vpop.f32.mrb[0].mxu0
    %192 = vmatprep.mubr.f32.mxu0 0.0
    %193 = vmatmul.mubr.f32.gmra.mrb[0].mxu0 %v121
    %v194 = vpop.f32.mrb[0].mxu0
    %v195 = vadd.f32 0.0, %v194
    %v196 = vpop.f32.mrb[0].mxu0
    %197 = vdwg.mxu0
    %v198 = vld [vmem:[%s6] sm:$0xff]
    %v199 = vld [vmem:[%s6 + $0x8] sm:$0xff]
    %v200 = vld [vmem:[%s6 + $0x10] sm:$0xff]
    %v201 = vld [vmem:[%s6 + $0x18] sm:$0xff]
    %v202 = vld [vmem:[%s6 + $0x20] sm:$0xff]
    %v203 = vld [vmem:[%s6 + $0x28] sm:$0xff]
    %v204 = vld [vmem:[%s6 + $0x30] sm:$0xff]
    %v205 = vld [vmem:[%s6 + $0x38] sm:$0xff]
    %v206 = vld [vmem:[%s6 + $0x40] sm:$0xff]
    %v207 = vld [vmem:[%s6 + $0x48] sm:$0xff]
    %v208 = vld [vmem:[%s6 + $0x50] sm:$0xff]
    %v209 = vld [vmem:[%s6 + $0x58] sm:$0xff]
    %v210 = vld [vmem:[%s6 + $0x60] sm:$0xff]
    %v211 = vld [vmem:[%s6 + $0x68] sm:$0xff]
    %v212 = vld [vmem:[%s6 + $0x70] sm:$0xff]
    %v213 = vld [vmem:[%s6 + $0x78] sm:$0xff]
    %214 = vmatprep.subr.mxu0 0.0
    %215 = vmatpush1.msra.mxu0 %v198
    %216 = vmatprep.subr.mxu0 0.0
    %217 = vmatpush1.msra.mxu0 %v199
    %218 = vmatprep.subr.mxu0 0.0
    %219 = vmatpush1.msra.mxu0 %v200
    %220 = vmatprep.subr.mxu0 0.0
    %221 = vmatpush1.msra.mxu0 %v201
    %222 = vmatprep.subr.mxu0 0.0
    %223 = vmatpush1.msra.mxu0 %v202
    %224 = vmatprep.subr.mxu0 0.0
    %225 = vmatpush1.msra.mxu0 %v203
    %226 = vmatprep.subr.mxu0 0.0
    %227 = vmatpush1.msra.mxu0 %v204
    %228 = vmatprep.subr.mxu0 0.0
    %229 = vmatpush1.msra.mxu0 %v205
    %230 = vmatprep.subr.mxu0 0.0
    %231 = vmatpush1.msra.mxu0 %v206
    %232 = vmatprep.subr.mxu0 0.0
    %233 = vmatpush1.msra.mxu0 %v207
    %234 = vmatprep.subr.mxu0 0.0
    %235 = vmatpush1.msra.mxu0 %v208
    %236 = vmatprep.subr.mxu0 0.0
    %237 = vmatpush1.msra.mxu0 %v209
    %238 = vmatprep.subr.mxu0 0.0
    %239 = vmatpush1.msra.mxu0 %v210
    %240 = vmatprep.subr.mxu0 0.0
    %241 = vmatpush1.msra.mxu0 %v211
    %242 = vmatprep.subr.mxu0 0.0
    %243 = vmatpush1.msra.mxu0 %v212
    %244 = vmatprep.subr.mxu0 0.0
    %245 = vmatpush1.msra.mxu0 %v213
    %246 = vmatprep.subr.mxu0 0.0
    %247 = vmatpush1.msra.mxu0 0.0
    %248 = vmatprep.subr.mxu0 0.0
    %249 = vmatpush1.msra.mxu0 0.0
    %250 = vmatprep.subr.mxu0 0.0
    %251 = vmatpush1.msra.mxu0 0.0
    %252 = vmatprep.subr.mxu0 0.0
    %253 = vmatpush1.msra.mxu0 0.0
    %254 = vmatprep.subr.mxu0 0.0
    %255 = vmatpush1.msra.mxu0 0.0
    %256 = vmatprep.subr.mxu0 0.0
    %257 = vmatpush1.msra.mxu0 0.0
    %258 = vmatprep.subr.mxu0 0.0
    %259 = vmatpush1.msra.mxu0 0.0
    %260 = vmatprep.subr.mxu0 0.0
    %261 = vmatpush1.msra.mxu0 0.0
    %262 = vmatprep.subr.mxu0 0.0
    %263 = vmatpush1.msra.mxu0 0.0
    %264 = vmatprep.subr.mxu0 0.0
    %265 = vmatpush1.msra.mxu0 0.0
    %266 = vmatprep.subr.mxu0 0.0
    %267 = vmatpush1.msra.mxu0 0.0
    %268 = vmatprep.subr.mxu0 0.0
    %269 = vmatpush1.msra.mxu0 0.0
    %270 = vmatprep.subr.mxu0 0.0
    %271 = vmatpush1.msra.mxu0 0.0
    %272 = vmatprep.subr.mxu0 0.0
    %273 = vmatpush1.msra.mxu0 0.0
    %274 = vmatprep.subr.mxu0 0.0
    %275 = vmatpush1.msra.mxu0 0.0
    %276 = vmatprep.subr.mxu0 0.0
    %277 = vmatpush1.msra.mxu0 0.0
    %278 = vmatprep.mubr.f32.mxu0 0.0
    %279 = vmatmul.mubr.f32.gmra.mrb[0].mxu0 %v190
    %v280 = vpop.f32.mrb[0].mxu0
    %v281 = vadd.f32 0.0, %v280
    %v282 = vpop.f32.mrb[0].mxu0
    %283 = vmatprep.mubr.f32.mxu0 0.0
    %284 = vmatmul.mubr.f32.gmra.mrb[0].mxu0 %v195
    %v285 = vpop.f32.mrb[0].mxu0
    %v286 = vadd.f32 0.0, %v285
    %v287 = vpop.f32.mrb[0].mxu0
    %288 = vdwg.mxu0
    %v289 = vld [vmem:[%s0] sm:$0xff]
    loop: start=0, step=1, limit=3
    $region58: #{tpu_custom_call.1} parent=1 // loop_pre_header
      _
    $region59: #{tpu_custom_call.1} parent=1 // loop_header
      %s291 = sphi 0, %s295
      %p292 = scmp.ge.s32.totalorder %s291, 3
      %v296 = vphi %v289, %v918
      %v297 = vphi %v289, %v888
    $region60: #{tpu_custom_call.1} parent=1 // loop_header_branch
      %294 = sbr.rel (%p292) target = $region64
    $region61: #{tpu_custom_call.1} parent=1 // loop_body
      %vm298 = vcmask 261120
      %v300 = vsel %vm298, %v296, 0
      %302 = vmatprep.subr.mxu0 %v54
      %303 = vmatpush1.msra.mxu0 %v53
      %304 = vmatprep.subr.mxu0 %v56
      %305 = vmatpush1.msra.mxu0 %v55
      %306 = vmatprep.subr.mxu0 %v58
      %307 = vmatpush1.msra.mxu0 %v57
      %308 = vmatprep.subr.mxu0 %v60
      %309 = vmatpush1.msra.mxu0 %v59
      %310 = vmatprep.subr.mxu0 0.0
      %311 = vmatpush1.msra.mxu0 0.0
      %312 = vmatprep.subr.mxu0 0.0
      %313 = vmatpush1.msra.mxu0 0.0
      %314 = vmatprep.subr.mxu0 0.0
      %315 = vmatpush1.msra.mxu0 0.0
      %316 = vmatprep.subr.mxu0 0.0
      %317 = vmatpush1.msra.mxu0 0.0
      %318 = vmatprep.subr.mxu0 0.0
      %319 = vmatpush1.msra.mxu0 0.0
      %320 = vmatprep.subr.mxu0 0.0
      %321 = vmatpush1.msra.mxu0 0.0
      %322 = vmatprep.subr.mxu0 0.0
      %323 = vmatpush1.msra.mxu0 0.0
      %324 = vmatprep.subr.mxu0 0.0
      %325 = vmatpush1.msra.mxu0 0.0
      %326 = vmatprep.subr.mxu0 0.0
      %327 = vmatpush1.msra.mxu0 0.0
      %328 = vmatprep.subr.mxu0 0.0
      %329 = vmatpush1.msra.mxu0 0.0
      %330 = vmatprep.subr.mxu0 0.0
      %331 = vmatpush1.msra.mxu0 0.0
      %332 = vmatprep.subr.mxu0 0.0
      %333 = vmatpush1.msra.mxu0 0.0
      %334 = vmatprep.subr.mxu0 0.0
      %335 = vmatpush1.msra.mxu0 0.0
      %336 = vmatprep.subr.mxu0 0.0
      %337 = vmatpush1.msra.mxu0 0.0
      %338 = vmatprep.subr.mxu0 0.0
      %339 = vmatpush1.msra.mxu0 0.0
      %340 = vmatprep.subr.mxu0 0.0
      %341 = vmatpush1.msra.mxu0 0.0
      %342 = vmatprep.subr.mxu0 0.0
      %343 = vmatpush1.msra.mxu0 0.0
      %344 = vmatprep.subr.mxu0 0.0
      %345 = vmatpush1.msra.mxu0 0.0
      %346 = vmatprep.subr.mxu0 0.0
      %347 = vmatpush1.msra.mxu0 0.0
      %348 = vmatprep.subr.mxu0 0.0
      %349 = vmatpush1.msra.mxu0 0.0
      %350 = vmatprep.subr.mxu0 0.0
      %351 = vmatpush1.msra.mxu0 0.0
      %352 = vmatprep.subr.mxu0 0.0
      %353 = vmatpush1.msra.mxu0 0.0
      %354 = vmatprep.subr.mxu0 0.0
      %355 = vmatpush1.msra.mxu0 0.0
      %356 = vmatprep.subr.mxu0 0.0
      %357 = vmatpush1.msra.mxu0 0.0
      %358 = vmatprep.subr.mxu0 0.0
      %359 = vmatpush1.msra.mxu0 0.0
      %360 = vmatprep.subr.mxu0 0.0
      %361 = vmatpush1.msra.mxu0 0.0
      %362 = vmatprep.subr.mxu0 0.0
      %363 = vmatpush1.msra.mxu0 0.0
      %364 = vmatprep.subr.mxu0 0.0
      %365 = vmatpush1.msra.mxu0 0.0
      %366 = vmatprep.mubr.f32.mxu0 0.0
      %367 = vmatmul.mubr.f32.gmra.mrb[0].mxu0 %v300
      %v368 = vpop.f32.mrb[0].mxu0
      %v369 = vadd.f32 0.0, %v368
      %v370 = vpop.f32.mrb[0].mxu0
      %v371 = vadd.f32 0.0, %v370
      %372 = vdwg.mxu0
      %v373 = vpack.c.bf16 %v369, %v369
      %v374 = vpack.c.bf16 %v371, %v371
      %v377 = vunpack.c.l.b16 %v49
      %v378 = vunpack.c.l.b16 %v50
      %v379 = vpack.c.b16 %v378, %v377
      %v381 = vsel %vm116, %v379, 0
      %vm383 = vcmask 1043456
      %v385 = vsel %vm383, %v373, 0
      %v388 = vsel %vm383, %v374, 0
      %390 = vmatprep.subr.bf16.mxu0 %v388
      %391 = vmatpush1.bf16.msra.mxu0 %v385
      %392 = vmatprep.subr.bf16.mxu0 0
      %393 = vmatpush1.bf16.msra.mxu0 0
      %394 = vmatprep.subr.bf16.mxu0 0
      %395 = vmatpush1.bf16.msra.mxu0 0
      %396 = vmatprep.subr.bf16.mxu0 0
      %397 = vmatpush1.bf16.msra.mxu0 0
      %398 = vmatprep.subr.bf16.mxu0 0
      %399 = vmatpush1.bf16.msra.mxu0 0
      %400 = vmatprep.subr.bf16.mxu0 0
      %401 = vmatpush1.bf16.msra.mxu0 0
      %402 = vmatprep.subr.bf16.mxu0 0
      %403 = vmatpush1.bf16.msra.mxu0 0
      %404 = vmatprep.subr.bf16.mxu0 0
      %405 = vmatpush1.bf16.msra.mxu0 0
      %406 = vmatprep.subr.bf16.mxu0 0
      %407 = vmatpush1.bf16.msra.mxu0 0
      %408 = vmatprep.subr.bf16.mxu0 0
      %409 = vmatpush1.bf16.msra.mxu0 0
      %410 = vmatprep.subr.bf16.mxu0 0
      %411 = vmatpush1.bf16.msra.mxu0 0
      %412 = vmatprep.subr.bf16.mxu0 0
      %413 = vmatpush1.bf16.msra.mxu0 0
      %414 = vmatprep.subr.bf16.mxu0 0
      %415 = vmatpush1.bf16.msra.mxu0 0
      %416 = vmatprep.subr.bf16.mxu0 0
      %417 = vmatpush1.bf16.msra.mxu0 0
      %418 = vmatprep.subr.bf16.mxu0 0
      %419 = vmatpush1.bf16.msra.mxu0 0
      %420 = vmatprep.subr.bf16.mxu0 0
      %421 = vmatpush1.bf16.msra.mxu0 0
      %422 = vmatprep.mubr.bf16.mxu0 0
      %423 = vmatmul.mubr.bf16.gmra.mrb[0].mxu0 %v381
      %v424 = vpop.f32.mrb[0].mxu0
      %v425 = vadd.f32 0.0, %v424
      %v426 = vpop.f32.mrb[0].mxu0
      %v427 = vadd.f32 0.0, %v426
      %v428 = vpop.f32.mrb[0].mxu0
      %v429 = vadd.f32 0.0, %v428
      %v430 = vpop.f32.mrb[0].mxu0
      %v431 = vadd.f32 0.0, %v430
      %432 = vdwg.mxu0
      %v435 = vunpack.c.l.b16 %v51
      %v436 = vunpack.c.l.b16 %v52
      %v437 = vpack.c.b16 %v436, %v435
      %439 = vrot.lane.b32.xlu0 %v374, 124
      %v440 = vpop.permute.xlu0 %439
      %v442 = vsel %vm116, %v437, 0
      %v445 = vsel %vm383, %v440, 0
      %447 = vmatprep.subr.bf16.mxu0 0
      %448 = vmatpush1.bf16.msra.mxu0 %v445
      %449 = vmatprep.subr.bf16.mxu0 0
      %450 = vmatpush1.bf16.msra.mxu0 0
      %451 = vmatprep.subr.bf16.mxu0 0
      %452 = vmatpush1.bf16.msra.mxu0 0
      %453 = vmatprep.subr.bf16.mxu0 0
      %454 = vmatpush1.bf16.msra.mxu0 0
      %455 = vmatprep.subr.bf16.mxu0 0
      %456 = vmatpush1.bf16.msra.mxu0 0
      %457 = vmatprep.subr.bf16.mxu0 0
      %458 = vmatpush1.bf16.msra.mxu0 0
      %459 = vmatprep.subr.bf16.mxu0 0
      %460 = vmatpush1.bf16.msra.mxu0 0
      %461 = vmatprep.subr.bf16.mxu0 0
      %462 = vmatpush1.bf16.msra.mxu0 0
      %463 = vmatprep.subr.bf16.mxu0 0
      %464 = vmatpush1.bf16.msra.mxu0 0
      %465 = vmatprep.subr.bf16.mxu0 0
      %466 = vmatpush1.bf16.msra.mxu0 0
      %467 = vmatprep.subr.bf16.mxu0 0
      %468 = vmatpush1.bf16.msra.mxu0 0
      %469 = vmatprep.subr.bf16.mxu0 0
      %470 = vmatpush1.bf16.msra.mxu0 0
      %471 = vmatprep.subr.bf16.mxu0 0
      %472 = vmatpush1.bf16.msra.mxu0 0
      %473 = vmatprep.subr.bf16.mxu0 0
      %474 = vmatpush1.bf16.msra.mxu0 0
      %475 = vmatprep.subr.bf16.mxu0 0
      %476 = vmatpush1.bf16.msra.mxu0 0
      %477 = vmatprep.subr.bf16.mxu0 0
      %478 = vmatpush1.bf16.msra.mxu0 0
      %479 = vmatprep.mubr.bf16.mxu0 0
      %480 = vmatmul.mubr.bf16.gmra.mrb[0].mxu0 %v442
      %v481 = vpop.f32.mrb[0].mxu0
      %v482 = vadd.f32 %v427, %v481
      %v483 = vpop.f32.mrb[0].mxu0
      %v484 = vpop.f32.mrb[0].mxu0
      %v485 = vadd.f32 %v431, %v484
      %v486 = vpop.f32.mrb[0].mxu0
      %487 = vdwg.mxu0
      %v488 = vadd.f32 %v482, %v281
      %v489 = vadd.f32 %v485, %v286
      %vm490 = vcmp.gt.f32.partialorder %v488, 0.0
      %vm491 = vcmp.gt.f32.partialorder %v489, 0.0
      %v492 = vmul.f32 %v488, 0.2
      %v493 = vmul.f32 %v489, 0.2
      %v494 = vsel %vm490, %v488, %v492
      %v495 = vsel %vm491, %v489, %v493
      %vm496 = vcmask 31744
      %v497 = vsel %vm496, %v494, -inf
      %v498 = vsel %vm496, %v495, -inf
      %v499 = vmax.f32 %v497, %v498
      %v500 = vrot.slane %v499, 4
      %v501 = vmax.f32 %v499, %v500
      %v502 = vrot.slane %v501, 2
      %v503 = vmax.f32 %v501, %v502
      %v504 = vrot.slane %v503, 1
      %v505 = vmax.f32 %v503, %v504
      %v506 = vsub.f32 %v494, %v505
      %v507 = vsub.f32 %v495, %v505
      %v508 = vmul.f32 %v506, 1.442695
      %v509 = vpow.pop %v508
      %v510 = vmul.f32 %v507, 1.442695
      %v511 = vpow.pop %v510
      %v512 = vpack.c.bf16 %v511, %v509
      %v514 = vsel %vm496, %v512, 0
      %vm516 = vcmask 1041408
      %v518 = vsel %vm516, %v62, 0
      %520 = vmatprep.subr.bf16.mxu0 0
      %521 = vmatpush1.bf16.msra.mxu0 %v518
      %522 = vmatprep.subr.bf16.mxu0 0
      %523 = vmatpush1.bf16.msra.mxu0 0
      %524 = vmatprep.subr.bf16.mxu0 0
      %525 = vmatpush1.bf16.msra.mxu0 0
      %526 = vmatprep.subr.bf16.mxu0 0
      %527 = vmatpush1.bf16.msra.mxu0 0
      %528 = vmatprep.subr.bf16.mxu0 0
      %529 = vmatpush1.bf16.msra.mxu0 0
      %530 = vmatprep.subr.bf16.mxu0 0
      %531 = vmatpush1.bf16.msra.mxu0 0
      %532 = vmatprep.subr.bf16.mxu0 0
      %533 = vmatpush1.bf16.msra.mxu0 0
      %534 = vmatprep.subr.bf16.mxu0 0
      %535 = vmatpush1.bf16.msra.mxu0 0
      %536 = vmatprep.subr.bf16.mxu0 0
      %537 = vmatpush1.bf16.msra.mxu0 0
      %538 = vmatprep.subr.bf16.mxu0 0
      %539 = vmatpush1.bf16.msra.mxu0 0
      %540 = vmatprep.subr.bf16.mxu0 0
      %541 = vmatpush1.bf16.msra.mxu0 0
      %542 = vmatprep.subr.bf16.mxu0 0
      %543 = vmatpush1.bf16.msra.mxu0 0
      %544 = vmatprep.subr.bf16.mxu0 0
      %545 = vmatpush1.bf16.msra.mxu0 0
      %546 = vmatprep.subr.bf16.mxu0 0
      %547 = vmatpush1.bf16.msra.mxu0 0
      %548 = vmatprep.subr.bf16.mxu0 0
      %549 = vmatpush1.bf16.msra.mxu0 0
      %550 = vmatprep.subr.bf16.mxu0 0
      %551 = vmatpush1.bf16.msra.mxu0 0
      %552 = vmatprep.mubr.bf16.mxu0 0
      %553 = vmatmul.mubr.bf16.gmra.mrb[0].mxu0 %v514
      %v554 = vpop.f32.mrb[0].mxu0
      %v555 = vadd.f32 0.0, %v554
      %v556 = vpop.f32.mrb[0].mxu0
      %v557 = vpop.f32.mrb[0].mxu0
      %v558 = vadd.f32 0.0, %v557
      %v559 = vpop.f32.mrb[0].mxu0
      %560 = vdwg.mxu0
      %v561 = vmul.f32 %v555, %v190
      %v562 = vmul.f32 %v558, %v195
      %v563 = vmul.f32 %v561, %v425
      %v564 = vmul.f32 %v562, %v429
      %v565 = vpack.c.bf16 %v564, %v563
      %567 = vxpose.xlu0.c.b16.start [1/8] %v437, 128
      %568 = vxpose.xlu0.c.b16.cont [2/8] 0, 128
      %569 = vxpose.xlu0.c.b16.cont [3/8] 0, 128
      %570 = vxpose.xlu0.c.b16.cont [4/8] 0, 128
      %571 = vxpose.xlu0.c.b16.cont [5/8] 0, 128
      %572 = vxpose.xlu0.c.b16.cont [6/8] 0, 128
      %573 = vxpose.xlu0.c.b16.cont [7/8] 0, 128
      %574 = vxpose.xlu0.c.b16.end [8/8] 0, 128
      %v575 = vpop.trf.xlu0
      %v576 = vpop.trf.xlu0
      %v577 = vpop.trf.xlu0
      %v578 = vpop.trf.xlu0
      %v579 = vpop.trf.xlu0
      %v580 = vpop.trf.xlu0
      %v581 = vpop.trf.xlu0
      %v582 = vpop.trf.xlu0
      %vm583 = vcmask 130048
      %v585 = vsel %vm583, %v575, 0
      %587 = vmatprep.subr.bf16.mxu0 %v512
      %588 = vmatpush1.bf16.msra.mxu0 %v565
      %589 = vmatprep.subr.bf16.mxu0 0
      %590 = vmatpush1.bf16.msra.mxu0 0
      %591 = vmatprep.subr.bf16.mxu0 0
      %592 = vmatpush1.bf16.msra.mxu0 0
      %593 = vmatprep.subr.bf16.mxu0 0
      %594 = vmatpush1.bf16.msra.mxu0 0
      %595 = vmatprep.subr.bf16.mxu0 0
      %596 = vmatpush1.bf16.msra.mxu0 0
      %597 = vmatprep.subr.bf16.mxu0 0
      %598 = vmatpush1.bf16.msra.mxu0 0
      %599 = vmatprep.subr.bf16.mxu0 0
      %600 = vmatpush1.bf16.msra.mxu0 0
      %601 = vmatprep.subr.bf16.mxu0 0
      %602 = vmatpush1.bf16.msra.mxu0 0
      %603 = vmatprep.subr.bf16.mxu0 0
      %604 = vmatpush1.bf16.msra.mxu0 0
      %605 = vmatprep.subr.bf16.mxu0 0
      %606 = vmatpush1.bf16.msra.mxu0 0
      %607 = vmatprep.subr.bf16.mxu0 0
      %608 = vmatpush1.bf16.msra.mxu0 0
      %609 = vmatprep.subr.bf16.mxu0 0
      %610 = vmatpush1.bf16.msra.mxu0 0
      %611 = vmatprep.subr.bf16.mxu0 0
      %612 = vmatpush1.bf16.msra.mxu0 0
      %613 = vmatprep.subr.bf16.mxu0 0
      %614 = vmatpush1.bf16.msra.mxu0 0
      %615 = vmatprep.subr.bf16.mxu0 0
      %616 = vmatpush1.bf16.msra.mxu0 0
      %617 = vmatprep.subr.bf16.mxu0 0
      %618 = vmatpush1.bf16.msra.mxu0 0
      %619 = vmatprep.mubr.bf16.mxu0 0
      %620 = vmatmul.mubr.bf16.gmra.mrb[0].mxu0 %v585
      %v621 = vpop.f32.mrb[0].mxu0
      %v622 = vadd.f32 0.0, %v621
      %v623 = vpop.f32.mrb[0].mxu0
      %v624 = vadd.f32 0.0, %v623
      %v625 = vpop.f32.mrb[0].mxu0
      %v626 = vpop.f32.mrb[0].mxu0
      %627 = vdwg.mxu0
      %v628 = vadd.f32 %v624, 1e-16
      %v629 = vrcp.pop %v628
      %v631 = vsel %vm496, %v629, 0
      %v634 = vsel %vm383, %v61, 0
      %636 = vmatprep.subr.mxu0 0.0
      %637 = vmatpush1.msra.mxu0 %v634
      %638 = vmatprep.subr.mxu0 0.0
      %639 = vmatpush1.msra.mxu0 0.0
      %640 = vmatprep.subr.mxu0 0.0
      %641 = vmatpush1.msra.mxu0 0.0
      %642 = vmatprep.subr.mxu0 0.0
      %643 = vmatpush1.msra.mxu0 0.0
      %644 = vmatprep.subr.mxu0 0.0
      %645 = vmatpush1.msra.mxu0 0.0
      %646 = vmatprep.subr.mxu0 0.0
      %647 = vmatpush1.msra.mxu0 0.0
      %648 = vmatprep.subr.mxu0 0.0
      %649 = vmatpush1.msra.mxu0 0.0
      %650 = vmatprep.subr.mxu0 0.0
      %651 = vmatpush1.msra.mxu0 0.0
      %652 = vmatprep.subr.mxu0 0.0
      %653 = vmatpush1.msra.mxu0 0.0
      %654 = vmatprep.subr.mxu0 0.0
      %655 = vmatpush1.msra.mxu0 0.0
      %656 = vmatprep.subr.mxu0 0.0
      %657 = vmatpush1.msra.mxu0 0.0
      %658 = vmatprep.subr.mxu0 0.0
      %659 = vmatpush1.msra.mxu0 0.0
      %660 = vmatprep.subr.mxu0 0.0
      %661 = vmatpush1.msra.mxu0 0.0
      %662 = vmatprep.subr.mxu0 0.0
      %663 = vmatpush1.msra.mxu0 0.0
      %664 = vmatprep.subr.mxu0 0.0
      %665 = vmatpush1.msra.mxu0 0.0
      %666 = vmatprep.subr.mxu0 0.0
      %667 = vmatpush1.msra.mxu0 0.0
      %668 = vmatprep.subr.mxu0 0.0
      %669 = vmatpush1.msra.mxu0 0.0
      %670 = vmatprep.subr.mxu0 0.0
      %671 = vmatpush1.msra.mxu0 0.0
      %672 = vmatprep.subr.mxu0 0.0
      %673 = vmatpush1.msra.mxu0 0.0
      %674 = vmatprep.subr.mxu0 0.0
      %675 = vmatpush1.msra.mxu0 0.0
      %676 = vmatprep.subr.mxu0 0.0
      %677 = vmatpush1.msra.mxu0 0.0
      %678 = vmatprep.subr.mxu0 0.0
      %679 = vmatpush1.msra.mxu0 0.0
      %680 = vmatprep.subr.mxu0 0.0
      %681 = vmatpush1.msra.mxu0 0.0
      %682 = vmatprep.subr.mxu0 0.0
      %683 = vmatpush1.msra.mxu0 0.0
      %684 = vmatprep.subr.mxu0 0.0
      %685 = vmatpush1.msra.mxu0 0.0
      %686 = vmatprep.subr.mxu0 0.0
      %687 = vmatpush1.msra.mxu0 0.0
      %688 = vmatprep.subr.mxu0 0.0
      %689 = vmatpush1.msra.mxu0 0.0
      %690 = vmatprep.subr.mxu0 0.0
      %691 = vmatpush1.msra.mxu0 0.0
      %692 = vmatprep.subr.mxu0 0.0
      %693 = vmatpush1.msra.mxu0 0.0
      %694 = vmatprep.subr.mxu0 0.0
      %695 = vmatpush1.msra.mxu0 0.0
      %696 = vmatprep.subr.mxu0 0.0
      %697 = vmatpush1.msra.mxu0 0.0
      %698 = vmatprep.subr.mxu0 0.0
      %699 = vmatpush1.msra.mxu0 0.0
      %700 = vmatprep.mubr.f32.mxu0 0.0
      %701 = vmatmul.mubr.f32.gmra.mrb[0].mxu0 %v631
      %v702 = vpop.f32.mrb[0].mxu0
      %v703 = vadd.f32 0.0, %v702
      %v704 = vpop.f32.mrb[0].mxu0
      %705 = vdwg.mxu0
      %v706 = vmul.f32 %v622, %v703
      %707 = vmatprep.subr.mxu0 0.0
      %708 = vmatpush1.msra.mxu0 %v63
      %709 = vmatprep.subr.mxu0 0.0
      %710 = vmatpush1.msra.mxu0 %v64
      %711 = vmatprep.subr.mxu0 0.0
      %712 = vmatpush1.msra.mxu0 %v65
      %713 = vmatprep.subr.mxu0 0.0
      %714 = vmatpush1.msra.mxu0 %v66
      %715 = vmatprep.subr.mxu0 0.0
      %716 = vmatpush1.msra.mxu0 %v67
      %717 = vmatprep.subr.mxu0 0.0
      %718 = vmatpush1.msra.mxu0 %v68
      %719 = vmatprep.subr.mxu0 0.0
      %720 = vmatpush1.msra.mxu0 %v69
      %721 = vmatprep.subr.mxu0 0.0
      %722 = vmatpush1.msra.mxu0 %v70
      %723 = vmatprep.subr.mxu0 0.0
      %724 = vmatpush1.msra.mxu0 %v71
      %725 = vmatprep.subr.mxu0 0.0
      %726 = vmatpush1.msra.mxu0 %v72
      %727 = vmatprep.subr.mxu0 0.0
      %728 = vmatpush1.msra.mxu0 %v73
      %729 = vmatprep.subr.mxu0 0.0
      %730 = vmatpush1.msra.mxu0 %v74
      %731 = vmatprep.subr.mxu0 0.0
      %732 = vmatpush1.msra.mxu0 %v75
      %733 = vmatprep.subr.mxu0 0.0
      %734 = vmatpush1.msra.mxu0 %v76
      %735 = vmatprep.subr.mxu0 0.0
      %736 = vmatpush1.msra.mxu0 %v77
      %737 = vmatprep.subr.mxu0 0.0
      %738 = vmatpush1.msra.mxu0 %v78
      %739 = vmatprep.subr.mxu0 0.0
      %740 = vmatpush1.msra.mxu0 0.0
      %741 = vmatprep.subr.mxu0 0.0
      %742 = vmatpush1.msra.mxu0 0.0
      %743 = vmatprep.subr.mxu0 0.0
      %744 = vmatpush1.msra.mxu0 0.0
      %745 = vmatprep.subr.mxu0 0.0
      %746 = vmatpush1.msra.mxu0 0.0
      %747 = vmatprep.subr.mxu0 0.0
      %748 = vmatpush1.msra.mxu0 0.0
      %749 = vmatprep.subr.mxu0 0.0
      %750 = vmatpush1.msra.mxu0 0.0
      %751 = vmatprep.subr.mxu0 0.0
      %752 = vmatpush1.msra.mxu0 0.0
      %753 = vmatprep.subr.mxu0 0.0
      %754 = vmatpush1.msra.mxu0 0.0
      %755 = vmatprep.subr.mxu0 0.0
      %756 = vmatpush1.msra.mxu0 0.0
      %757 = vmatprep.subr.mxu0 0.0
      %758 = vmatpush1.msra.mxu0 0.0
      %759 = vmatprep.subr.mxu0 0.0
      %760 = vmatpush1.msra.mxu0 0.0
      %761 = vmatprep.subr.mxu0 0.0
      %762 = vmatpush1.msra.mxu0 0.0
      %763 = vmatprep.subr.mxu0 0.0
      %764 = vmatpush1.msra.mxu0 0.0
      %765 = vmatprep.subr.mxu0 0.0
      %766 = vmatpush1.msra.mxu0 0.0
      %767 = vmatprep.subr.mxu0 0.0
      %768 = vmatpush1.msra.mxu0 0.0
      %769 = vmatprep.subr.mxu0 0.0
      %770 = vmatpush1.msra.mxu0 0.0
      %771 = vmatprep.mubr.f32.mxu0 0.0
      %772 = vmatmul.mubr.f32.gmra.mrb[0].mxu0 %v706
      %v773 = vpop.f32.mrb[0].mxu0
      %v774 = vadd.f32 %v92, %v773
      %v775 = vpop.f32.mrb[0].mxu0
      %776 = vdwg.mxu0
      %vm777 = vcmp.gt.f32.partialorder %v774, 0.0
      %v778 = vmul.f32 %v774, 1.442695
      %v779 = vpow.pop %v778
      %v780 = vsub.f32 %v779, 1.0
      %v781 = vsel %vm777, %v774, %v780
      %783 = vrot.lane.b32.xlu0 %v297, 32
      %v784 = vpop.permute.xlu0 %783
      %v786 = vsel %vm298, %v781, %v784
      %vm787 = vcmask 523264
      %v789 = vsel %vm787, %v786, 0
      %791 = vmatprep.subr.mxu0 0.0
      %792 = vmatpush1.msra.mxu0 %v79
      %793 = vmatprep.subr.mxu0 0.0
      %794 = vmatpush1.msra.mxu0 %v80
      %795 = vmatprep.subr.mxu0 0.0
      %796 = vmatpush1.msra.mxu0 %v81
      %797 = vmatprep.subr.mxu0 0.0
      %798 = vmatpush1.msra.mxu0 %v82
      %799 = vmatprep.subr.mxu0 0.0
      %800 = vmatpush1.msra.mxu0 %v83
      %801 = vmatprep.subr.mxu0 0.0
      %802 = vmatpush1.msra.mxu0 %v84
      %803 = vmatprep.subr.mxu0 0.0
      %804 = vmatpush1.msra.mxu0 %v85
      %805 = vmatprep.subr.mxu0 0.0
      %806 = vmatpush1.msra.mxu0 %v86
      %807 = vmatprep.subr.mxu0 0.0
      %808 = vmatpush1.msra.mxu0 0.0
      %809 = vmatprep.subr.mxu0 0.0
      %810 = vmatpush1.msra.mxu0 0.0
      %811 = vmatprep.subr.mxu0 0.0
      %812 = vmatpush1.msra.mxu0 0.0
      %813 = vmatprep.subr.mxu0 0.0
      %814 = vmatpush1.msra.mxu0 0.0
      %815 = vmatprep.subr.mxu0 0.0
      %816 = vmatpush1.msra.mxu0 0.0
      %817 = vmatprep.subr.mxu0 0.0
      %818 = vmatpush1.msra.mxu0 0.0
      %819 = vmatprep.subr.mxu0 0.0
      %820 = vmatpush1.msra.mxu0 0.0
      %821 = vmatprep.subr.mxu0 0.0
      %822 = vmatpush1.msra.mxu0 0.0
      %823 = vmatprep.subr.mxu0 0.0
      %824 = vmatpush1.msra.mxu0 0.0
      %825 = vmatprep.subr.mxu0 0.0
      %826 = vmatpush1.msra.mxu0 0.0
      %827 = vmatprep.subr.mxu0 0.0
      %828 = vmatpush1.msra.mxu0 0.0
      %829 = vmatprep.subr.mxu0 0.0
      %830 = vmatpush1.msra.mxu0 0.0
      %831 = vmatprep.subr.mxu0 0.0
      %832 = vmatpush1.msra.mxu0 0.0
      %833 = vmatprep.subr.mxu0 0.0
      %834 = vmatpush1.msra.mxu0 0.0
      %835 = vmatprep.subr.mxu0 0.0
      %836 = vmatpush1.msra.mxu0 0.0
      %837 = vmatprep.subr.mxu0 0.0
      %838 = vmatpush1.msra.mxu0 0.0
      %839 = vmatprep.subr.mxu0 0.0
      %840 = vmatpush1.msra.mxu0 0.0
      %841 = vmatprep.subr.mxu0 0.0
      %842 = vmatpush1.msra.mxu0 0.0
      %843 = vmatprep.subr.mxu0 0.0
      %844 = vmatpush1.msra.mxu0 0.0
      %845 = vmatprep.subr.mxu0 0.0
      %846 = vmatpush1.msra.mxu0 0.0
      %847 = vmatprep.subr.mxu0 0.0
      %848 = vmatpush1.msra.mxu0 0.0
      %849 = vmatprep.subr.mxu0 0.0
      %850 = vmatpush1.msra.mxu0 0.0
      %851 = vmatprep.subr.mxu0 0.0
      %852 = vmatpush1.msra.mxu0 0.0
      %853 = vmatprep.subr.mxu0 0.0
      %854 = vmatpush1.msra.mxu0 0.0
      %855 = vmatprep.mubr.f32.mxu0 0.0
      %856 = vmatmul.mubr.f32.gmra.mrb[0].mxu0 %v789
      %v857 = vpop.f32.mrb[0].mxu0
      %v858 = vadd.f32 %v99, %v857
      %v859 = vpop.f32.mrb[0].mxu0
      %860 = vdwg.mxu0
      %v861 = vxor.u32 %v858, 2147483648
      %v862 = vmul.f32 %v861, 1.442695
      %v863 = vpow.pop %v862
      %v864 = vadd.f32 %v863, 1.0
      %v865 = vrcp.pop %v864
      %v866 = vmul.f32 1.0, %v865
      %868 = vrot.lane.b32.xlu0 %v858, 32
      %v869 = vpop.permute.xlu0 %868
      %v871 = vmul.f32 %v866, %v869
      %873 = vrot.lane.b32.xlu0 %v871, 64
      %v874 = vpop.permute.xlu0 %873
      %v876 = vadd.f32 %v858, %v874
      %v877 = vtanh.pop %v876
      %v878 = vsub.f32 1.0, %v866
      %880 = vrot.lane.b32.xlu0 %v877, 96
      %v881 = vpop.permute.xlu0 %880
      %v883 = vmul.f32 %v878, %v881
      %v884 = vmul.f32 %v866, %v784
      %v885 = vadd.f32 %v883, %v884
      %887 = vrot.lane.b32.xlu0 %v885, 96
      %v888 = vpop.permute.xlu0 %887
      %v890 = vsel %vm298, %v888, 0.0
      %891 = vadd.xlane.f32.xlu0 %v890
      %v892 = vpop.xlane.xlu0 %891
      %v893 = vrcp.pop 32.0
      %v894 = vmul.f32 %v892, %v893
      %v895 = vsub.f32 %v885, %v894
      %v896 = vmul.f32 %v895, %v895
      %898 = vrot.lane.b32.xlu0 %v896, 96
      %v899 = vpop.permute.xlu0 %898
      %v901 = vsel %vm298, %v899, 0.0
      %902 = vadd.xlane.f32.xlu0 %v901
      %v903 = vpop.xlane.xlu0 %902
      %v904 = vmul.f32 %v903, %v893
      %v905 = vadd.f32 %v904, 1e-05
      %v906 = vrsqrt.pop %v905
      %v907 = vmul.f32 %v895, %v906
      %908 = vrot.lane.b32.xlu0 %v106, 32
      %v909 = vpop.permute.xlu0 %908
      %v911 = vmul.f32 %v907, %v909
      %912 = vrot.lane.b32.xlu0 %v112, 32
      %v913 = vpop.permute.xlu0 %912
      %v915 = vadd.f32 %v911, %v913
      %917 = vrot.lane.b32.xlu0 %v915, 96
      %v918 = vpop.permute.xlu0 %917
    $region62: #{tpu_custom_call.1} parent=1 // loop_footer
      %s295 = sadd.s32 1, %s291
    $region63: #{tpu_custom_call.1} parent=1 // loop_footer_branch
      %290 = sbr.rel target = $region59
    $region64: #{tpu_custom_call.1} parent=1 // loop_exit
      _
    %vm920 = vcmask 261120
    %921 = vst.msk [vmem:[#allocation2] sm:$0xff] %vm920, %v296
    // Predicated region
    $region65: #{tpu_custom_call.1} parent=1 // pred_check
      _
    $region66: #{tpu_custom_call.1} parent=1 // pred_check_branch
      %923 = sbr.rel (0) target = $region68
    $region67: #{tpu_custom_call.1} parent=1 // pred_region
      %s925 = ssub.s32 128, 128
      %926 = vsyncadd [#allocation3], %s925
      %s928 = sshll.u32 [#allocation2], 4
      %s929 = int_to_ptr.vmem [resolvable:$true] %s928
      %931 = dma.vmem_to_hbm [thread:$0]  %s929, 128, %s14, [#allocation3]
    $region68: #{tpu_custom_call.1} parent=1 // pred_fallthru
      _
    // Predicated region
    $region69: #{tpu_custom_call.1} parent=1 // pred_check
      _
    $region70: #{tpu_custom_call.1} parent=1 // pred_check_branch
      %933 = sbr.rel (0) target = $region72
    $region71: #{tpu_custom_call.1} parent=1 // pred_region
      %934 = dma.done [#allocation3], 128
    $region72: #{tpu_custom_call.1} parent=1 // pred_fallthru
      _
    %935 = vsyncpa [#allocation3], 1

</llo_original>
